<compile_context>
chip_gen: v5e
topology: v5e:2x2
jax: 0.10.0
libtpu: 0.0.40
codegen_flags: <defaults>
</compile_context>

<pallas_src>
import jax
import jax.numpy as jnp
from jax.experimental import pallas as pl
from jax.experimental.pallas import tpu as pltpu

_LANE = 128


def _chip_params():
    """Return (target block bytes, #TensorCores per chip) for the local TPU."""
    try:
        kind = jax.devices()[0].device_kind.lower()
    except Exception:  # pragma: no cover - defensive
        kind = ""
    if "v7" in kind:
        # ~3.2 TB/s HBM: 6 MiB blocks keep the ~0.35 us/step overhead <10%.
        # 2x(in+out) double buffering = 24 MiB < 32 MiB default scoped VMEM.
        return 6 * 1024 * 1024, 2
    if "v6" in kind:
        # 16 MiB of double-buffered in+out < 32 MiB default scoped VMEM.
        return 4 * 1024 * 1024, 1
    # v5e & unknown: 8 MiB double-buffered < 16 MiB default scoped VMEM.
    return 2 * 1024 * 1024, 1


def _neg_scale_kernel(lam_ref, g_ref, o_ref):
    # Backward: dx = -lambda * g.  lambda is a runtime SMEM scalar; the
    # multiply runs in f32 and is cast back to the grad dtype.
    lam = lam_ref[0, 0]
    o_ref[...] = (g_ref[...].astype(jnp.float32) * (-lam)).astype(o_ref.dtype)


def _reverse_grad_2d(g2d, lam, _tile_rows=None):
    """Run the -lambda * g kernel over a (rows, W) lane-dense slab.

    `_tile_rows` is a test-only override to force multi-step / ragged grids
    at small shapes.
    """
    rows, w = g2d.shape
    itemsize = jnp.dtype(g2d.dtype).itemsize
    # Dtype-aware sublane multiple: 8 for f32, 16 for bf16, 32 for int8/fp8.
    sub = max(8, 32 // itemsize)
    block_bytes, num_cores = _chip_params()

    if _tile_rows is not None:
        tile_rows = int(_tile_rows)
    else:
        tile_rows = max(sub, (block_bytes // (w * itemsize)) // sub * sub)
        if tile_rows >= rows:
            if (num_cores > 1 and rows >= 2 * sub
                    and rows * w * itemsize > (1 << 20)):
                # v7x: split a single-block mid-size launch into >=2
                # "parallel" steps so both TensorCores stream.
                half = -(-rows // 2)
                tile_rows = ((half + sub - 1) // sub) * sub
            else:
                # One block equal to the full array dims (always legal).
                tile_rows = rows
    grid = pl.cdiv(rows, tile_rows)

    lam2d = lam.astype(jnp.float32).reshape(1, 1)
    return pl.pallas_call(
        _neg_scale_kernel,
        out_shape=jax.ShapeDtypeStruct((rows, w), g2d.dtype),
        grid=(grid,),
        in_specs=[
            pl.BlockSpec(memory_space=pltpu.MemorySpace.SMEM),  # lambda
            pl.BlockSpec((tile_rows, w), lambda i: (i, 0)),      # grads
        ],
        out_specs=pl.BlockSpec((tile_rows, w), lambda i: (i, 0)),
        input_output_aliases={1: 0},
        compiler_params=pltpu.CompilerParams(
            dimension_semantics=("parallel",)),
    )(lam2d, g2d)


def _reverse_grad_ragged(g, lam):
    """Ragged case: g.size is not a multiple of 128.

    Process the flat gradient as a lane-tiled (1, n) slab; the ragged last
    block's out-of-bounds lanes are read-clamped and write-masked by Pallas,
    so no pad / slice copies are needed and HBM traffic stays at 2N bytes.
    """
    n = g.size
    flat = g.reshape(1, n)
    itemsize = jnp.dtype(g.dtype).itemsize
    block_bytes, _ = _chip_params()
    # A (1, T) tile occupies 8 sublanes worth of VMEM; budget accordingly.
    tile_w = max(_LANE, (block_bytes // (8 * itemsize)) // _LANE * _LANE)
    if tile_w >= n:
        tile_w = n  # single full-extent block (always legal)
    grid = pl.cdiv(n, tile_w)

    lam2d = lam.astype(jnp.float32).reshape(1, 1)
    out = pl.pallas_call(
        _neg_scale_kernel,
        out_shape=jax.ShapeDtypeStruct((1, n), g.dtype),
        grid=(grid,),
        in_specs=[
            pl.BlockSpec(memory_space=pltpu.MemorySpace.SMEM),
            pl.BlockSpec((1, tile_w), lambda i: (0, i)),
        ],
        out_specs=pl.BlockSpec((1, tile_w), lambda i: (0, i)),
        input_output_aliases={1: 0},
        compiler_params=pltpu.CompilerParams(
            dimension_semantics=("parallel",)),
    )(lam2d, flat)
    return out.reshape(g.shape)


def _reverse_grad(g, lam):
    """dx = -lambda * g for an arbitrary-shaped gradient tensor."""
    n = g.size
    if n == 0:
        return g

    itemsize = jnp.dtype(g.dtype).itemsize
    sub = max(8, 32 // itemsize)

    # Pick the widest lane-dense last dim that divides the element count AND
    # keeps rows >= the sublane pack (dense vregs, unmasked stores); fall
    # back to the widest divisor if no width satisfies the row constraint.
    width = None
    fallback = None
    for w in (4096, 2048, 1024, 512, 256, 128):
        if n % w == 0:
            if fallback is None:
                fallback = w
            if n // w >= sub:
                width = w
                break
    if width is None:
        width = fallback

    if width is None:
        # Size not a multiple of 128: masked-tail path (no pad/slice copies).
        return _reverse_grad_ragged(g, lam)

    g2d = g.reshape(n // width, width)  # contiguous reshape: no copy
    return _reverse_grad_2d(g2d, lam).reshape(g.shape)


@jax.custom_vjp
def _grl(x, lam):
    # Identity forward: no kernel launch, no HBM traffic (matches PyTorch's
    # x.clone() semantics exactly since JAX arrays are immutable).
    return x


def _grl_fwd(x, lam):
    return x, lam


def _grl_bwd(lam, g):
    # PyTorch returns None for lambda's grad; the JAX equivalent is a zero.
    return _reverse_grad(g, lam), jnp.zeros((), jnp.float32)


_grl.defvjp(_grl_fwd, _grl_bwd)


def gradient_reversal(x, lambda_=1.0):
    """Forward = identity; backward = -lambda_ * upstream grads (Pallas).

    `lambda_` may be a Python float or a JAX scalar (e.g. an annealed,
    traced value) — either way the kernel receives it as a runtime scalar.
    """
    lam = jnp.asarray(lambda_, dtype=jnp.float32).reshape(())
    return _grl(x, lam)


class GradientReversal:
    """JAX/Pallas port of the PyTorch GradientReversal module."""

    def __init__(self, lambda_=1.0):
        self.lambda_ = lambda_

    def __call__(self, x):
        return gradient_reversal(x, self.lambda_)


if __name__ == "__main__":
    key = jax.random.PRNGKey(0)
    # NCHW conv-feature-like input.
    x = jax.random.normal(key, (2, 4, 16, 16), dtype=jnp.float32)

    grl = GradientReversal(lambda_=1.0)

    # Forward: identity.
    y = grl(x)
    jax.block_until_ready(y)
    assert y.shape == x.shape and y.dtype == x.dtype
    assert bool(jnp.allclose(y, x)), "forward must be identity"

    # Backward: upstream grads scaled by -lambda_.
    loss_fn = lambda inp: jnp.sum(grl(inp) * 2.0)
    dx = jax.grad(loss_fn)(x)
    jax.block_until_ready(dx)
    assert bool(jnp.allclose(dx, -2.0 * jnp.ones_like(x), atol=1e-6)), \
        "backward must multiply upstream grads by -lambda_"

    # Traced (annealed) lambda under jit: one compile serves all lambdas.
    @jax.jit
    def grad_with_lam(inp, lam):
        return jax.grad(lambda z: jnp.sum(gradient_reversal(z, lam)))(inp)

    dx_a = grad_with_lam(x, jnp.float32(0.25))
    dx_b = grad_with_lam(x, jnp.float32(0.75))
    jax.block_until_ready((dx_a, dx_b))
    assert bool(jnp.allclose(dx_a, -0.25 * jnp.ones_like(x), atol=1e-6))
    assert bool(jnp.allclose(dx_b, -0.75 * jnp.ones_like(x), atol=1e-6))

    # bf16, wide lane-dense path (rows >= sublane pack).
    g_big = jax.random.normal(key, (3, 5, 64, 96), dtype=jnp.bfloat16)
    exp_big = (-0.5 * g_big.astype(jnp.float32)).astype(jnp.bfloat16)
    jax.block_until_ready(exp_big)
    dx_big = _reverse_grad(g_big, jnp.float32(0.5))
    jax.block_until_ready(dx_big)
    assert dx_big.shape == g_big.shape and dx_big.dtype == g_big.dtype
    assert bool(jnp.allclose(dx_big.astype(jnp.float32),
                             exp_big.astype(jnp.float32), atol=1e-2))

    # Ragged size (not a multiple of 128): masked-tail path, no pad/slice.
    g_rag = jax.random.normal(key, (7, 37), dtype=jnp.float32)
    exp_rag = -1.5 * g_rag
    jax.block_until_ready(exp_rag)
    dx_rag = _reverse_grad(g_rag, jnp.float32(1.5))
    jax.block_until_ready(dx_rag)
    assert dx_rag.shape == g_rag.shape
    assert bool(jnp.allclose(dx_rag, exp_rag, atol=1e-6))

    # Ragged row-block + input/output aliasing (grid = 3, last block masked).
    g_rb = jax.random.normal(key, (20, 256), dtype=jnp.float32)
    exp_rb = -2.0 * g_rb
    jax.block_until_ready(exp_rb)
    dx_rb = _reverse_grad_2d(g_rb, jnp.float32(2.0), _tile_rows=8)
    jax.block_until_ready(dx_rb)
    assert bool(jnp.allclose(dx_rb, exp_rb, atol=1e-6)), \
        "ragged row-block with aliasing must not write garbage rows"

    print("KERNEL_OK")
</pallas_src>

<mosaic_0001>
module attributes {stable_mosaic.version = 11 : i64} {
  func.func @_neg_scale_kernel(%arg0: i32, %arg1: memref<1x1xf32, #tpu.memory_space<smem>>, %arg2: memref<8x256xf32, #tpu.memory_space<vmem>>, %arg3: memref<8x256xf32, #tpu.memory_space<vmem>>) attributes {dimension_semantics = [#tpu.dimension_semantics<parallel>], iteration_bounds = array<i64: 1>, scalar_prefetch = 0 : i64, scratch_operands = 0 : i64, tpu.core_type = #tpu.core_type<tc>, window_params = [{transform_indices = @transform_0, window_bounds = array<i64: 1, 1>}, {transform_indices = @transform_1, window_bounds = array<i64: 8, 256>}, {transform_indices = @transform_2, window_bounds = array<i64: 8, 256>}]} {
    %c0 = arith.constant 0 : index
    %c0_0 = arith.constant 0 : index
    %0 = memref.load %arg1[%c0, %c0_0] : memref<1x1xf32, #tpu.memory_space<smem>>
    %c0_1 = arith.constant 0 : index
    %c0_2 = arith.constant 0 : index
    %1 = vector.load %arg2[%c0_1, %c0_2] : memref<8x256xf32, #tpu.memory_space<vmem>>, vector<8x256xf32>
    %cst = arith.constant 0.000000e+00 : f32
    %2 = arith.subf %cst, %0 : f32
    %3 = vector.broadcast %2 : f32 to vector<8x256xf32>
    %4 = arith.mulf %1, %3 : vector<8x256xf32>
    %c0_3 = arith.constant 0 : index
    %c0_4 = arith.constant 0 : index
    %5 = vector.load %arg3[%c0_3, %c0_4] : memref<8x256xf32, #tpu.memory_space<vmem>>, vector<8x256xf32>
    tpu.vector_store %arg3[%c0_3, %c0_4], %4 {strides = array<i32>} : memref<8x256xf32, #tpu.memory_space<vmem>>, vector<8x256xf32>,
    return
  }
  func.func @transform_0(%arg0: i32) -> (i32, i32) {
    %c0_i32 = arith.constant 0 : i32
    %c0_i32_0 = arith.constant 0 : i32
    %c0_i32_1 = arith.constant 0 : i32
    return %c0_i32, %c0_i32_0 : i32, i32
  }
  func.func @transform_1(%arg0: i32) -> (i32, i32) {
    %c0_i32 = arith.constant 0 : i32
    %c0_i32_0 = arith.constant 0 : i32
    return %arg0, %c0_i32 : i32, i32
  }
  func.func @transform_2(%arg0: i32) -> (i32, i32) {
    %c0_i32 = arith.constant 0 : i32
    %c0_i32_0 = arith.constant 0 : i32
    return %arg0, %c0_i32 : i32, i32
  }
}

</mosaic_0001>

<llo_original>
// kernel: tpu_custom_call.1
$region0: #{tpu_custom_call.1}
  #allocation0 [shape = 'u32[]', space=smem, size = 0x4, offset = 0x4, fixed_abs, tag = 'smem constant byte address 0x4 - core index']
  #allocation1 [shape = 'u32[72,128]{1,0:T(1,128)}', space=vmem, size = 0x9000, scoped, tag = 'internal scratch']
  #allocation2 [shape = 'f32[1,1]{1,0:T(1,128)S(6)}', space=smem, size = 0x200, scoped, tag = 'scoped memory for tpu_custom_call.1']
  %s0 = inlined_call_operand.<no memory space> [shape: f32[1,1], index: 0, kind: input, shape index: {}]
  %s1 = inlined_call_operand.hbm [shape: f32[8,256], index: 1, kind: input, shape index: {}, may-alias: {1,2}]
  %s2 = inlined_call_operand.hbm [shape: f32[8,256], index: 2, kind: output, shape index: {}, may-alias: {1,2}]
  %s3 = sld [smem:[#allocation0]]
  $region22: #{tpu_custom_call.1} parent=0
    _
  %s5 = ssub.s32 1, %s3
  %s6 = scalar_select 0, %s5, %s3
  %7 = sst [smem:[#allocation2]] %s0
  $region1: #{tpu_custom_call.1} parent=0
    #allocation3 [shape = 'u8[8192]{0}', space=vmem, size = 0x2000, scoped, tag = 'input window, operand 1, single buffered']
    #allocation4 [shape = 's32[1]{0}', space=sflag, size = 0x4, scoped, tag = 'scoped memory for tpu_custom_call.1']
    #allocation5 [shape = 's32[1]{0}', space=sflag, size = 0x4, scoped, tag = 'scoped memory for tpu_custom_call.1']
    #allocation6 [shape = 'u8[8192]{0}', space=vmem, size = 0x2000, scoped, tag = 'output window, operand 0, single buffered']
    %8 = vsyncpa [#allocation4], 0
    %9 = vsyncpa [#allocation5], 0
    // Predicated region
    $region2: #{tpu_custom_call.1} parent=1 // pred_check
      _
    $region3: #{tpu_custom_call.1} parent=1 // pred_check_branch
      %11 = sbr.rel (0) target = $region5
    $region4: #{tpu_custom_call.1} parent=1 // pred_region
      _
    $region5: #{tpu_custom_call.1} parent=1 // pred_fallthru
      _
    // Predicated region
    $region6: #{tpu_custom_call.1} parent=1 // pred_check
      _
    $region7: #{tpu_custom_call.1} parent=1 // pred_check_branch
      %13 = sbr.rel (0) target = $region9
    $region8: #{tpu_custom_call.1} parent=1 // pred_region
      %15 = vsyncadd [#allocation4], 0
      %s17 = sshll.u32 %s1, 4
      %s18 = int_to_ptr.hbm [resolvable:$true] %s17
      %s19 = sshll.u32 [#allocation3], 4
      %s20 = int_to_ptr.vmem [resolvable:$true] %s19
      %22 = dma.hbm_to_vmem [thread:$0]  %s18, 256, %s20, [#allocation4]
    $region9: #{tpu_custom_call.1} parent=1 // pred_fallthru
      _
    // Predicated region
    $region10: #{tpu_custom_call.1} parent=1 // pred_check
      _
    $region11: #{tpu_custom_call.1} parent=1 // pred_check_branch
      %24 = sbr.rel (0) target = $region13
    $region12: #{tpu_custom_call.1} parent=1 // pred_region
      %26 = dma.done [#allocation4], 256
    $region13: #{tpu_custom_call.1} parent=1 // pred_fallthru
      _
    %s27 = sld [smem:[#allocation2]]
    %v28 = vld [vmem:[#allocation3] sm:$0xff]
    %v29 = vld [vmem:[#allocation3 + $0x8] sm:$0xff]
    %s30 = ssub.f32 0.0, %s27
    %v31 = vstv %s30
    %v32 = vmul.f32 %v28, %v31
    %v33 = vmul.f32 %v29, %v31
    %34 = vst [vmem:[#allocation6] sm:$0xff] %v32
    %35 = vst [vmem:[#allocation6 + $0x8] sm:$0xff] %v33
    // Predicated region
    $region14: #{tpu_custom_call.1} parent=1 // pred_check
      _
    $region15: #{tpu_custom_call.1} parent=1 // pred_check_branch
      %37 = sbr.rel (0) target = $region17
    $region16: #{tpu_custom_call.1} parent=1 // pred_region
      %39 = vsyncadd [#allocation5], 0
      %s41 = sshll.u32 [#allocation6], 4
      %s42 = int_to_ptr.vmem [resolvable:$true] %s41
      %s43 = sshll.u32 %s2, 4
      %s44 = int_to_ptr.hbm [resolvable:$true] %s43
      %46 = dma.vmem_to_hbm [thread:$0]  %s42, 256, %s44, [#allocation5]
    $region17: #{tpu_custom_call.1} parent=1 // pred_fallthru
      _
    // Predicated region
    $region18: #{tpu_custom_call.1} parent=1 // pred_check
      _
    $region19: #{tpu_custom_call.1} parent=1 // pred_check_branch
      %48 = sbr.rel (0) target = $region21
    $region20: #{tpu_custom_call.1} parent=1 // pred_region
      %50 = dma.done [#allocation5], 256
    $region21: #{tpu_custom_call.1} parent=1 // pred_fallthru
      _
    %51 = vsyncpa [#allocation4], 1
    %52 = vsyncpa [#allocation5], 1

</llo_original>
